<compile_context>
chip_gen: v5e
topology: v5e:2x2
jax: 0.10.0
libtpu: 0.0.40
codegen_flags: <defaults>
</compile_context>

<pallas_src>
import functools

import jax
import jax.numpy as jnp
from jax.experimental import pallas as pl
from jax.experimental.pallas import tpu as pltpu

IN_FEATURES = 20
HIDDEN_FEATURES = 256
OUT_FEATURES = 10
LANE = 128          # lane width: pad the output feature dim to this
SUBLANE = 8         # sublane width: pad/align the batch tile to this
MAX_TM = 1024       # max rows per batch tile (keeps VMEM well under limits)


def mlp_kernel(x_ref, w1_ref, b1_ref, w2_ref, b2_ref, o_ref):
    # hidden = relu(X @ W1 + b1), accumulated in f32.
    h = jnp.dot(x_ref[...], w1_ref[...], preferred_element_type=jnp.float32)
    h = jnp.maximum(h + b1_ref[...].astype(jnp.float32), 0.0)
    # out = hidden @ W2 + b2 (W2/b2 are zero-padded to 128 lanes -> lane-dense store).
    o = jnp.dot(h.astype(w2_ref.dtype), w2_ref[...],
                preferred_element_type=jnp.float32)
    o = o + b2_ref[...].astype(jnp.float32)
    o_ref[...] = o.astype(o_ref.dtype)


def _round_up(x, m):
    return ((x + m - 1) // m) * m


@functools.partial(jax.jit, static_argnames=())
def mlp_forward(x, w1, b1, w2, b2):
    B = x.shape[0]
    out_features = w2.shape[1]

    # Pick the batch tile: as large as possible up to MAX_TM, sublane-aligned.
    tm = min(MAX_TM, _round_up(B, SUBLANE))
    b_padded = _round_up(B, tm)
    n_padded = _round_up(out_features, LANE)

    # Pad the batch (streamed input) and the output feature dim (lane-dense store).
    if b_padded != B:
        x = jnp.pad(x, ((0, b_padded - B), (0, 0)))
    w2p = jnp.pad(w2, ((0, 0), (0, n_padded - out_features)))
    b2p = jnp.pad(b2, ((0, 0), (0, n_padded - out_features)))

    grid = (pl.cdiv(b_padded, tm),)

    out_padded = pl.pallas_call(
        mlp_kernel,
        out_shape=jax.ShapeDtypeStruct((b_padded, n_padded), x.dtype),
        grid=grid,
        in_specs=[
            # X streams through VMEM in (tm, 20) blocks.
            pl.BlockSpec((tm, x.shape[1]), lambda i: (i, 0)),
            # Parameters: constant block index -> stay resident in VMEM.
            pl.BlockSpec(w1.shape, lambda i: (0, 0)),
            pl.BlockSpec(b1.shape, lambda i: (0, 0)),
            pl.BlockSpec(w2p.shape, lambda i: (0, 0)),
            pl.BlockSpec(b2p.shape, lambda i: (0, 0)),
        ],
        out_specs=pl.BlockSpec((tm, n_padded), lambda i: (i, 0)),
        compiler_params=pltpu.CompilerParams(
            dimension_semantics=("parallel",),
        ),
    )(x, w1, b1, w2p, b2p)

    # Strip batch padding and the lane padding of the output features.
    return out_padded[:B, :out_features]


def init_params(key, in_features=IN_FEATURES, hidden_features=HIDDEN_FEATURES,
                out_features=OUT_FEATURES, dtype=jnp.float32):
    # Deterministic init mimicking nn.Linear defaults: U(-1/sqrt(fan_in), 1/sqrt(fan_in)).
    k1, k2, k3, k4 = jax.random.split(key, 4)
    bound1 = 1.0 / jnp.sqrt(in_features)
    bound2 = 1.0 / jnp.sqrt(hidden_features)
    # Stored as (in, out) — transpose of PyTorch's (out, in) weight layout.
    w1 = jax.random.uniform(k1, (in_features, hidden_features), dtype,
                            minval=-bound1, maxval=bound1)
    b1 = jax.random.uniform(k2, (1, hidden_features), dtype,
                            minval=-bound1, maxval=bound1)
    w2 = jax.random.uniform(k3, (hidden_features, out_features), dtype,
                            minval=-bound2, maxval=bound2)
    b2 = jax.random.uniform(k4, (1, out_features), dtype,
                            minval=-bound2, maxval=bound2)
    return w1, b1, w2, b2


def mlp_reference(x, w1, b1, w2, b2):
    h = jnp.maximum(x @ w1 + b1, 0.0)
    return h @ w2 + b2


if __name__ == "__main__":
    key = jax.random.PRNGKey(0)
    kx, kp = jax.random.split(key)

    batch = 2
    x = jax.random.normal(kx, (batch, IN_FEATURES), jnp.float32)
    w1, b1, w2, b2 = init_params(kp)

    out = mlp_forward(x, w1, b1, w2, b2)
    out = jax.block_until_ready(out)

    ref = mlp_reference(x, w1, b1, w2, b2)
    assert out.shape == (batch, OUT_FEATURES)
    assert jnp.allclose(out, ref, atol=1e-5, rtol=1e-5)

    # Sanity-check a larger, non-tile-multiple batch to exercise the pipeline.
    xb = jax.random.normal(kx, (3000, IN_FEATURES), jnp.float32)
    outb = jax.block_until_ready(mlp_forward(xb, w1, b1, w2, b2))
    refb = mlp_reference(xb, w1, b1, w2, b2)
    assert outb.shape == (3000, OUT_FEATURES)
    assert jnp.allclose(outb, refb, atol=1e-4, rtol=1e-4)

    print("KERNEL_OK")
</pallas_src>

<mosaic_0001>
module attributes {stable_mosaic.version = 11 : i64} {
  func.func @mlp_kernel(%arg0: i32, %arg1: memref<8x20xf32, #tpu.memory_space<vmem>>, %arg2: memref<20x256xf32, #tpu.memory_space<vmem>>, %arg3: memref<1x256xf32, #tpu.memory_space<vmem>>, %arg4: memref<256x128xf32, #tpu.memory_space<vmem>>, %arg5: memref<1x128xf32, #tpu.memory_space<vmem>>, %arg6: memref<8x128xf32, #tpu.memory_space<vmem>>) attributes {dimension_semantics = [#tpu.dimension_semantics<parallel>], iteration_bounds = array<i64: 1>, scalar_prefetch = 0 : i64, scratch_operands = 0 : i64, tpu.core_type = #tpu.core_type<tc>, window_params = [{transform_indices = @transform_0, window_bounds = array<i64: 8, 20>}, {pipeline_mode = #tpu.pipeline_mode<synchronous>, transform_indices = @transform_1, window_bounds = array<i64: 20, 256>}, {pipeline_mode = #tpu.pipeline_mode<synchronous>, transform_indices = @transform_2, window_bounds = array<i64: 1, 256>}, {pipeline_mode = #tpu.pipeline_mode<synchronous>, transform_indices = @transform_3, window_bounds = array<i64: 256, 128>}, {pipeline_mode = #tpu.pipeline_mode<synchronous>, transform_indices = @transform_4, window_bounds = array<i64: 1, 128>}, {transform_indices = @transform_5, window_bounds = array<i64: 8, 128>}]} {
    %c0 = arith.constant 0 : index
    %c0_0 = arith.constant 0 : index
    %0 = vector.load %arg1[%c0, %c0_0] : memref<8x20xf32, #tpu.memory_space<vmem>>, vector<8x20xf32>
    %c0_1 = arith.constant 0 : index
    %c0_2 = arith.constant 0 : index
    %1 = vector.load %arg2[%c0_1, %c0_2] : memref<20x256xf32, #tpu.memory_space<vmem>>, vector<20x256xf32>
    %cst = arith.constant dense<0.000000e+00> : vector<8x256xf32>
    %2 = tpu.matmul %0, %1, %cst {dimension_numbers = #tpu.dot_dimension_numbers<[1], [0], [0], [1], [0, 0, 1, 1], [], []>} : vector<8x20xf32>, vector<20x256xf32>, vector<8x256xf32> -> vector<8x256xf32>
    %c0_3 = arith.constant 0 : index
    %c0_4 = arith.constant 0 : index
    %3 = vector.load %arg3[%c0_3, %c0_4] : memref<1x256xf32, #tpu.memory_space<vmem>>, vector<1x256xf32>
    %4 = vector.broadcast %3 : vector<1x256xf32> to vector<8x256xf32>
    %5 = arith.addf %2, %4 : vector<8x256xf32>
    %cst_5 = arith.constant 0.000000e+00 : f32
    %6 = vector.broadcast %cst_5 : f32 to vector<8x256xf32>
    %7 = arith.maximumf %5, %6 : vector<8x256xf32>
    %c0_6 = arith.constant 0 : index
    %c0_7 = arith.constant 0 : index
    %8 = vector.load %arg4[%c0_6, %c0_7] : memref<256x128xf32, #tpu.memory_space<vmem>>, vector<256x128xf32>
    %cst_8 = arith.constant dense<0.000000e+00> : vector<8x128xf32>
    %9 = tpu.matmul %7, %8, %cst_8 {dimension_numbers = #tpu.dot_dimension_numbers<[1], [0], [0], [1], [0, 0, 1, 1], [], []>} : vector<8x256xf32>, vector<256x128xf32>, vector<8x128xf32> -> vector<8x128xf32>
    %c0_9 = arith.constant 0 : index
    %c0_10 = arith.constant 0 : index
    %10 = vector.load %arg5[%c0_9, %c0_10] : memref<1x128xf32, #tpu.memory_space<vmem>>, vector<1x128xf32>
    %11 = vector.broadcast %10 : vector<1x128xf32> to vector<8x128xf32>
    %12 = arith.addf %9, %11 : vector<8x128xf32>
    %c0_11 = arith.constant 0 : index
    %c0_12 = arith.constant 0 : index
    %13 = vector.load %arg6[%c0_11, %c0_12] : memref<8x128xf32, #tpu.memory_space<vmem>>, vector<8x128xf32>
    tpu.vector_store %arg6[%c0_11, %c0_12], %12 {strides = array<i32>} : memref<8x128xf32, #tpu.memory_space<vmem>>, vector<8x128xf32>,
    return
  }
  func.func @transform_0(%arg0: i32) -> (i32, i32) {
    %c0_i32 = arith.constant 0 : i32
    %c0_i32_0 = arith.constant 0 : i32
    return %arg0, %c0_i32 : i32, i32
  }
  func.func @transform_1(%arg0: i32) -> (i32, i32) {
    %c0_i32 = arith.constant 0 : i32
    %c0_i32_0 = arith.constant 0 : i32
    %c0_i32_1 = arith.constant 0 : i32
    return %c0_i32, %c0_i32_0 : i32, i32
  }
  func.func @transform_2(%arg0: i32) -> (i32, i32) {
    %c0_i32 = arith.constant 0 : i32
    %c0_i32_0 = arith.constant 0 : i32
    %c0_i32_1 = arith.constant 0 : i32
    return %c0_i32, %c0_i32_0 : i32, i32
  }
  func.func @transform_3(%arg0: i32) -> (i32, i32) {
    %c0_i32 = arith.constant 0 : i32
    %c0_i32_0 = arith.constant 0 : i32
    %c0_i32_1 = arith.constant 0 : i32
    return %c0_i32, %c0_i32_0 : i32, i32
  }
  func.func @transform_4(%arg0: i32) -> (i32, i32) {
    %c0_i32 = arith.constant 0 : i32
    %c0_i32_0 = arith.constant 0 : i32
    %c0_i32_1 = arith.constant 0 : i32
    return %c0_i32, %c0_i32_0 : i32, i32
  }
  func.func @transform_5(%arg0: i32) -> (i32, i32) {
    %c0_i32 = arith.constant 0 : i32
    %c0_i32_0 = arith.constant 0 : i32
    return %arg0, %c0_i32 : i32, i32
  }
}

</mosaic_0001>

<llo_original>
// kernel: mlp_forward.1
$region0: #{mlp_forward.1}
  #allocation0 [shape = 'u32[]', space=smem, size = 0x4, offset = 0x4, fixed_abs, tag = 'smem constant byte address 0x4 - core index']
  #allocation1 [shape = 'u32[72,128]{1,0:T(1,128)}', space=vmem, size = 0x9000, scoped, tag = 'internal scratch']
  %s0 = inlined_call_operand.vmem [shape: f32[8,20], index: 0, kind: input, shape index: {}]
  %s1 = inlined_call_operand.vmem [shape: f32[20,256], index: 1, kind: input, shape index: {}]
  %s2 = inlined_call_operand.vmem [shape: f32[1,256], index: 2, kind: input, shape index: {}]
  %s3 = inlined_call_operand.vmem [shape: f32[256,128], index: 3, kind: input, shape index: {}]
  %s4 = inlined_call_operand.vmem [shape: f32[1,128], index: 4, kind: input, shape index: {}]
  %s5 = inlined_call_operand.vmem [shape: f32[8,128], index: 5, kind: output, shape index: {}]
  %s6 = sld [smem:[#allocation0]]
  $region30: #{mlp_forward.1} parent=0
    _
  %s8 = ssub.s32 1, %s6
  %s9 = scalar_select 0, %s8, %s6
  // Predicated region
  $region2: #{mlp_forward.1} parent=0 // pred_check
    _
  $region3: #{mlp_forward.1} parent=0 // pred_check_branch
    %11 = sbr.rel (0) target = $region5
  $region4: #{mlp_forward.1} parent=0 // pred_region
    _
  $region5: #{mlp_forward.1} parent=0 // pred_fallthru
    _
  // Predicated region
  $region6: #{mlp_forward.1} parent=0 // pred_check
    _
  $region7: #{mlp_forward.1} parent=0 // pred_check_branch
    %13 = sbr.rel (0) target = $region9
  $region8: #{mlp_forward.1} parent=0 // pred_region
    _
  $region9: #{mlp_forward.1} parent=0 // pred_fallthru
    _
  // Predicated region
  $region10: #{mlp_forward.1} parent=0 // pred_check
    _
  $region11: #{mlp_forward.1} parent=0 // pred_check_branch
    %15 = sbr.rel (0) target = $region13
  $region12: #{mlp_forward.1} parent=0 // pred_region
    _
  $region13: #{mlp_forward.1} parent=0 // pred_fallthru
    _
  // Predicated region
  $region14: #{mlp_forward.1} parent=0 // pred_check
    _
  $region15: #{mlp_forward.1} parent=0 // pred_check_branch
    %17 = sbr.rel (0) target = $region17
  $region16: #{mlp_forward.1} parent=0 // pred_region
    _
  $region17: #{mlp_forward.1} parent=0 // pred_fallthru
    _
  // Predicated region
  $region18: #{mlp_forward.1} parent=0 // pred_check
    _
  $region19: #{mlp_forward.1} parent=0 // pred_check_branch
    %19 = sbr.rel (0) target = $region21
  $region20: #{mlp_forward.1} parent=0 // pred_region
    _
  $region21: #{mlp_forward.1} parent=0 // pred_fallthru
    _
  %v20 = vld [vmem:[%s0] sm:$0xff]
  %v21 = vld [vmem:[%s1] sm:$0xff]
  %v22 = vld [vmem:[%s1 + $0x8] sm:$0xff]
  %v23 = vld [vmem:[%s1 + $0x10] sm:$0xff]
  %v24 = vld [vmem:[%s1 + $0x18] sm:$0xff]
  %v25 = vld [vmem:[%s1 + $0x20] sm:$0xf]
  %v26 = vld [vmem:[%s1 + $0x28] sm:$0xf]
  %v27 = vld [vmem:[%s2] sm:$0x3]
  %v29 = vperm.slane %v27, 0
  %v30 = vperm.slane %v27, 1
  %vm33 = vcmask 162816
  %v35 = vsel %vm33, %v20, 0
  %vm37 = vcmask 1043456
  %v39 = vsel %vm37, %v25, 0
  %v42 = vsel %vm37, %v26, 0
  %44 = vmatpush.msra.mxu0 0.0
  %45 = vmatpush.msra.mxu0 0.0
  %46 = vmatpush.msra.mxu0 0.0
  %47 = vmatpush.msra.mxu0 0.0
  %48 = vmatpush.msra.mxu0 0.0
  %49 = vmatpush.msra.mxu0 0.0
  %50 = vmatpush.msra.mxu0 0.0
  %51 = vmatpush.msra.mxu0 0.0
  %52 = vmatpush.msra.mxu0 0.0
  %53 = vmatpush.msra.mxu0 0.0
  %54 = vmatpush.msra.mxu0 0.0
  %55 = vmatpush.msra.mxu0 0.0
  %56 = vmatpush.msra.mxu0 0.0
  %57 = vmatpush.msra.mxu0 %v39
  %58 = vmatpush.msra.mxu0 %v23
  %59 = vmatpush.msra.mxu0 %v21
  %60 = vmatmul.f32.gmra.mxu0 %v35
  %v61 = vpop.f32.mrf.mxu0
  %v62 = vadd.f32 %v29, %v61
  %63 = vdwg.mxu0
  %64 = vmatpush.msra.mxu0 0.0
  %65 = vmatpush.msra.mxu0 0.0
  %66 = vmatpush.msra.mxu0 0.0
  %67 = vmatpush.msra.mxu0 0.0
  %68 = vmatpush.msra.mxu0 0.0
  %69 = vmatpush.msra.mxu0 0.0
  %70 = vmatpush.msra.mxu0 0.0
  %71 = vmatpush.msra.mxu0 0.0
  %72 = vmatpush.msra.mxu0 0.0
  %73 = vmatpush.msra.mxu0 0.0
  %74 = vmatpush.msra.mxu0 0.0
  %75 = vmatpush.msra.mxu0 0.0
  %76 = vmatpush.msra.mxu0 0.0
  %77 = vmatpush.msra.mxu0 %v42
  %78 = vmatpush.msra.mxu0 %v24
  %79 = vmatpush.msra.mxu0 %v22
  %80 = vmatmul.f32.gmra.mxu0 %v35
  %v81 = vpop.f32.mrf.mxu0
  %v82 = vadd.f32 %v30, %v81
  %83 = vdwg.mxu0
  %v84 = vmax.f32 %v62, 0.0
  %v85 = vmax.f32 %v82, 0.0
  %v86 = vld [vmem:[%s3] sm:$0xff]
  %v87 = vld [vmem:[%s3 + $0x8] sm:$0xff]
  %v88 = vld [vmem:[%s3 + $0x10] sm:$0xff]
  %v89 = vld [vmem:[%s3 + $0x18] sm:$0xff]
  %v90 = vld [vmem:[%s3 + $0x20] sm:$0xff]
  %v91 = vld [vmem:[%s3 + $0x28] sm:$0xff]
  %v92 = vld [vmem:[%s3 + $0x30] sm:$0xff]
  %v93 = vld [vmem:[%s3 + $0x38] sm:$0xff]
  %v94 = vld [vmem:[%s3 + $0x40] sm:$0xff]
  %v95 = vld [vmem:[%s3 + $0x48] sm:$0xff]
  %v96 = vld [vmem:[%s3 + $0x50] sm:$0xff]
  %v97 = vld [vmem:[%s3 + $0x58] sm:$0xff]
  %v98 = vld [vmem:[%s3 + $0x60] sm:$0xff]
  %v99 = vld [vmem:[%s3 + $0x68] sm:$0xff]
  %v100 = vld [vmem:[%s3 + $0x70] sm:$0xff]
  %v101 = vld [vmem:[%s3 + $0x78] sm:$0xff]
  %v102 = vld [vmem:[%s3 + $0x80] sm:$0xff]
  %v103 = vld [vmem:[%s3 + $0x88] sm:$0xff]
  %v104 = vld [vmem:[%s3 + $0x90] sm:$0xff]
  %v105 = vld [vmem:[%s3 + $0x98] sm:$0xff]
  %v106 = vld [vmem:[%s3 + $0xa0] sm:$0xff]
  %v107 = vld [vmem:[%s3 + $0xa8] sm:$0xff]
  %v108 = vld [vmem:[%s3 + $0xb0] sm:$0xff]
  %v109 = vld [vmem:[%s3 + $0xb8] sm:$0xff]
  %v110 = vld [vmem:[%s3 + $0xc0] sm:$0xff]
  %v111 = vld [vmem:[%s3 + $0xc8] sm:$0xff]
  %v112 = vld [vmem:[%s3 + $0xd0] sm:$0xff]
  %v113 = vld [vmem:[%s3 + $0xd8] sm:$0xff]
  %v114 = vld [vmem:[%s3 + $0xe0] sm:$0xff]
  %v115 = vld [vmem:[%s3 + $0xe8] sm:$0xff]
  %v116 = vld [vmem:[%s3 + $0xf0] sm:$0xff]
  %v117 = vld [vmem:[%s3 + $0xf8] sm:$0xff]
  %v118 = vld [vmem:[%s4] sm:$0x1]
  %v120 = vperm.slane %v118, 0
  %122 = vmatpush.msra.mxu0 %v101
  %123 = vmatpush.msra.mxu0 %v100
  %124 = vmatpush.msra.mxu0 %v99
  %125 = vmatpush.msra.mxu0 %v98
  %126 = vmatpush.msra.mxu0 %v97
  %127 = vmatpush.msra.mxu0 %v96
  %128 = vmatpush.msra.mxu0 %v95
  %129 = vmatpush.msra.mxu0 %v94
  %130 = vmatpush.msra.mxu0 %v93
  %131 = vmatpush.msra.mxu0 %v92
  %132 = vmatpush.msra.mxu0 %v91
  %133 = vmatpush.msra.mxu0 %v90
  %134 = vmatpush.msra.mxu0 %v89
  %135 = vmatpush.msra.mxu0 %v88
  %136 = vmatpush.msra.mxu0 %v87
  %137 = vmatpush.msra.mxu0 %v86
  %138 = vmatmul.f32.gmra.mxu0 %v84
  %v139 = vpop.f32.mrf.mxu0
  %v140 = vadd.f32 %v120, %v139
  %141 = vdwg.mxu0
  %142 = vmatpush.msra.mxu0 %v117
  %143 = vmatpush.msra.mxu0 %v116
  %144 = vmatpush.msra.mxu0 %v115
  %145 = vmatpush.msra.mxu0 %v114
  %146 = vmatpush.msra.mxu0 %v113
  %147 = vmatpush.msra.mxu0 %v112
  %148 = vmatpush.msra.mxu0 %v111
  %149 = vmatpush.msra.mxu0 %v110
  %150 = vmatpush.msra.mxu0 %v109
  %151 = vmatpush.msra.mxu0 %v108
  %152 = vmatpush.msra.mxu0 %v107
  %153 = vmatpush.msra.mxu0 %v106
  %154 = vmatpush.msra.mxu0 %v105
  %155 = vmatpush.msra.mxu0 %v104
  %156 = vmatpush.msra.mxu0 %v103
  %157 = vmatpush.msra.mxu0 %v102
  %158 = vmatmul.f32.gmra.mxu0 %v85
  %v159 = vpop.f32.mrf.mxu0
  %v160 = vadd.f32 %v140, %v159
  %161 = vdwg.mxu0
  %162 = vst [vmem:[%s5] sm:$0xff] %v160
  // Predicated region
  $region22: #{mlp_forward.1} parent=0 // pred_check
    _
  $region23: #{mlp_forward.1} parent=0 // pred_check_branch
    %164 = sbr.rel (0) target = $region25
  $region24: #{mlp_forward.1} parent=0 // pred_region
    _
  $region25: #{mlp_forward.1} parent=0 // pred_fallthru
    _
  // Predicated region
  $region26: #{mlp_forward.1} parent=0 // pred_check
    _
  $region27: #{mlp_forward.1} parent=0 // pred_check_branch
    %166 = sbr.rel (0) target = $region29
  $region28: #{mlp_forward.1} parent=0 // pred_region
    _
  $region29: #{mlp_forward.1} parent=0 // pred_fallthru
    _

</llo_original>
